<compile_context>
chip_gen: v7x
topology: tpu7x:2x2x1
jax: 0.10.0
libtpu: 0.0.40
codegen_flags: <defaults>
</compile_context>

<pallas_src>
import functools

import jax
import jax.numpy as jnp
from jax.experimental import pallas as pl
from jax.experimental.pallas import tpu as pltpu


def conv_block_kernel(x_ref, m1_ref, b1_ref, m2_ref, b2_ref, o_ref, pad_ref,
                      *, H, L, K):
    """Whole ConvBlock in one invocation.

    x_ref  : (H, L)            input rows, lanes index (n, w, c) -> (n*W + w)*C + c,  L = N*W*C
    m*_ref : (K, L, L)         banded, block-diag-over-batch conv matrices
    b*_ref : (1, L)            bias tiled across (n, w)
    o_ref  : (H, L)            output rows
    pad_ref: (H + 2*(K//2), L) VMEM scratch with a zero halo of K//2 rows top & bottom
    """
    P = K // 2

    # Zero only the halo rows; interior rows are fully overwritten below.
    halo = jnp.zeros((P, L), jnp.float32)
    pad_ref[pl.ds(0, P), :] = halo
    pad_ref[pl.ds(H + P, P), :] = halo

    # ---- stage 1: relu(x) into the interior rows ----
    pad_ref[pl.ds(P, H), :] = jnp.maximum(x_ref[...].astype(jnp.float32), 0.0)

    # ---- conv1: K row-shifted matmuls; kw taps + channel mixing + batch block-diag live in
    #      the banded matrices ----
    acc = jnp.zeros((H, L), jnp.float32)
    for kh in range(K):
        acc = acc + jnp.dot(pad_ref[pl.ds(kh, H), :], m1_ref[kh],
                            preferred_element_type=jnp.float32)
    acc = acc + b1_ref[...]                       # (1, L) broadcasts over rows

    # ---- stage 2: relu(conv1) back into the interior (halo rows stay zero) ----
    pad_ref[pl.ds(P, H), :] = jnp.maximum(acc, 0.0)

    # ---- conv2 ----
    acc2 = jnp.zeros((H, L), jnp.float32)
    for kh in range(K):
        acc2 = acc2 + jnp.dot(pad_ref[pl.ds(kh, H), :], m2_ref[kh],
                              preferred_element_type=jnp.float32)
    acc2 = acc2 + b2_ref[...]

    # ---- residual add: reload x from VMEM (not kept live across both convs) ----
    o_ref[...] = (acc2 + x_ref[...].astype(jnp.float32)).astype(o_ref.dtype)


# ------------------------- one-time weight preprocessing -------------------------
def _banded_conv_matrices(w_hwio, W):
    """Fold horizontal taps + channel mixing of a 'same' conv into K banded matrices.

    M[kh][ws*Cin + ci, w*Cout + co] = w_hwio[kh, kw, ci, co] with ws = w + kw - P; out-of-range
    horizontal taps are simply absent, which is exactly zero 'same' padding.
    """
    K, _, Cin, Cout = w_hwio.shape
    P = K // 2
    mats = []
    for kh in range(K):
        m = jnp.zeros((W * Cin, W * Cout), w_hwio.dtype)
        for kw in range(K):
            band = jnp.eye(W, W, k=P - kw, dtype=w_hwio.dtype)   # band[ws, w]=1 iff ws=w+kw-P
            m = m + jnp.einsum("sw,io->siwo", band,
                               w_hwio[kh, kw]).reshape(W * Cin, W * Cout)
        mats.append(m)
    return jnp.stack(mats)                                        # (K, W*Cin, W*Cout)


def prepare_conv_block_params(w1_oihw, b1, w2_oihw, b2, W, N):
    """Done once at init -- keep this out of the per-call hot path.

    Returns banded matrices expanded to block-diagonal over the batch (lane axis = N*W*C),
    plus biases tiled to a (1, N*W*C) row.
    """
    C = w1_oihw.shape[0]
    w1_hwio = jnp.transpose(w1_oihw, (2, 3, 1, 0))
    w2_hwio = jnp.transpose(w2_oihw, (2, 3, 1, 0))
    m1 = _banded_conv_matrices(w1_hwio, W)                        # (K, W*C, W*C)
    m2 = _banded_conv_matrices(w2_hwio, W)
    eye_n = jnp.eye(N, dtype=m1.dtype)
    # Block-diagonal over batch: full[k, n*WC + a, m*WC + b] = eye[n, m] * M[k, a, b]
    K, WC, _ = m1.shape
    m1_full = jnp.einsum("nm,kab->knamb", eye_n, m1).reshape(K, N * WC, N * WC)
    m2_full = jnp.einsum("nm,kab->knamb", eye_n, m2).reshape(K, N * WC, N * WC)
    b1row = jnp.tile(b1, N * W).reshape(1, N * W * C)
    b2row = jnp.tile(b2, N * W).reshape(1, N * W * C)
    return m1_full, b1row, m2_full, b2row


# --------------------------------- hot path ---------------------------------
def conv_block_apply(x_nchw, m1, b1row, m2, b2row):
    """NCHW in / NCHW out.  In an NHWC-native model the activation transposes below disappear
    and only the pallas_call remains."""
    N, C, H, W = x_nchw.shape
    K = m1.shape[0]
    L = m1.shape[1]                                # N * W * C (lane width, 128 for the demo)

    # (N, C, H, W) -> (H, N, W, C) -> (H, N*W*C): lanes index (n*W + w)*C + c.
    x_rows = jnp.transpose(x_nchw, (2, 0, 3, 1)).reshape(H, L)

    kernel = functools.partial(conv_block_kernel, H=H, L=L, K=K)
    out_rows = pl.pallas_call(
        kernel,
        out_shape=jax.ShapeDtypeStruct((H, L), x_nchw.dtype),
        grid_spec=pltpu.PrefetchScalarGridSpec(
            num_scalar_prefetch=0,
            grid=(1,),
            in_specs=[
                pl.BlockSpec((H, L), lambda i: (0, 0)),
                pl.BlockSpec((K, L, L), lambda i: (0, 0, 0)),
                pl.BlockSpec((1, L), lambda i: (0, 0)),
                pl.BlockSpec((K, L, L), lambda i: (0, 0, 0)),
                pl.BlockSpec((1, L), lambda i: (0, 0)),
            ],
            out_specs=pl.BlockSpec((H, L), lambda i: (0, 0)),
            scratch_shapes=[pltpu.VMEM((H + 2 * (K // 2), L), jnp.float32)],
        ),
        compiler_params=pltpu.CompilerParams(
            dimension_semantics=("arbitrary",)),
    )(x_rows, m1, b1row, m2, b2row)

    return jnp.transpose(out_rows.reshape(H, N, W, C), (1, 3, 0, 2))


# ---------------- pure-JAX reference (for correctness check) ----------------
def _conv_same_nchw(x, w_oihw, b):
    y = jax.lax.conv_general_dilated(
        x, w_oihw, window_strides=(1, 1), padding="SAME",
        dimension_numbers=("NCHW", "OIHW", "NCHW"))
    return y + b[None, :, None, None]


def conv_block_ref(x, w1, b1, w2, b2):
    skip = x
    h = jnp.maximum(x, 0.0)
    h = _conv_same_nchw(h, w1, b1)
    h = jnp.maximum(h, 0.0)
    h = _conv_same_nchw(h, w2, b2)
    return h + skip


if __name__ == "__main__":
    # Small shapes consistent with the module: batch=2, filters=4, spatial=16x16.
    N, C, H, W = 2, 4, 16, 16
    K = 3

    key = jax.random.PRNGKey(0)
    kx, kw1, kb1, kw2, kb2 = jax.random.split(key, 5)

    x = jax.random.normal(kx, (N, C, H, W), jnp.float32)

    # Deterministic init mimicking torch.nn.Conv2d defaults (uniform +-1/sqrt(fan_in));
    # conv2 weights scaled by 0.001 as in the module.
    fan_in = C * K * K
    bound = 1.0 / jnp.sqrt(float(fan_in))
    w1 = jax.random.uniform(kw1, (C, C, K, K), jnp.float32, -bound, bound)
    b1 = jax.random.uniform(kb1, (C,), jnp.float32, -bound, bound)
    w2 = jax.random.uniform(kw2, (C, C, K, K), jnp.float32, -bound, bound) * 0.001
    b2 = jax.random.uniform(kb2, (C,), jnp.float32, -bound, bound)

    # One-time weight prep, then the jitted hot path.
    params = prepare_conv_block_params(w1, b1, w2, b2, W, N)
    apply_fn = jax.jit(conv_block_apply)

    out = jax.block_until_ready(apply_fn(x, *params))
    ref = jax.block_until_ready(conv_block_ref(x, w1, b1, w2, b2))

    assert out.shape == (N, C, H, W), out.shape
    assert jnp.allclose(out, ref, atol=1e-4, rtol=1e-4), float(jnp.max(jnp.abs(out - ref)))

    print("KERNEL_OK")
</pallas_src>

<mosaic_0001>
module attributes {stable_mosaic.version = 11 : i64} {
  func.func @conv_block_kernel(%arg0: i32, %arg1: memref<16x128xf32, #tpu.memory_space<vmem>>, %arg2: memref<3x128x128xf32, #tpu.memory_space<vmem>>, %arg3: memref<1x128xf32, #tpu.memory_space<vmem>>, %arg4: memref<3x128x128xf32, #tpu.memory_space<vmem>>, %arg5: memref<1x128xf32, #tpu.memory_space<vmem>>, %arg6: memref<16x128xf32, #tpu.memory_space<vmem>>, %arg7: memref<18x128xf32, #tpu.memory_space<vmem>>) attributes {dimension_semantics = [#tpu.dimension_semantics<arbitrary>], iteration_bounds = array<i64: 1>, scalar_prefetch = 0 : i64, scratch_operands = 1 : i64, tpu.core_type = #tpu.core_type<tc>, window_params = [{pipeline_mode = #tpu.pipeline_mode<synchronous>, transform_indices = @transform_0, window_bounds = array<i64: 16, 128>}, {pipeline_mode = #tpu.pipeline_mode<synchronous>, transform_indices = @transform_1, window_bounds = array<i64: 3, 128, 128>}, {pipeline_mode = #tpu.pipeline_mode<synchronous>, transform_indices = @transform_2, window_bounds = array<i64: 1, 128>}, {pipeline_mode = #tpu.pipeline_mode<synchronous>, transform_indices = @transform_3, window_bounds = array<i64: 3, 128, 128>}, {pipeline_mode = #tpu.pipeline_mode<synchronous>, transform_indices = @transform_4, window_bounds = array<i64: 1, 128>}, {pipeline_mode = #tpu.pipeline_mode<synchronous>, transform_indices = @transform_5, window_bounds = array<i64: 16, 128>}]} {
    %cst = arith.constant 0.000000e+00 : f32
    %0 = vector.broadcast %cst : f32 to vector<1x128xf32>
    %c0 = arith.constant 0 : index
    %c0_0 = arith.constant 0 : index
    %1 = vector.load %arg7[%c0, %c0_0] : memref<18x128xf32, #tpu.memory_space<vmem>>, vector<1x128xf32>
    tpu.vector_store %arg7[%c0, %c0_0], %0 {strides = array<i32>} : memref<18x128xf32, #tpu.memory_space<vmem>>, vector<1x128xf32>,
    %c17 = arith.constant 17 : index
    %c0_1 = arith.constant 0 : index
    %2 = vector.load %arg7[%c17, %c0_1] : memref<18x128xf32, #tpu.memory_space<vmem>>, vector<1x128xf32>
    tpu.vector_store %arg7[%c17, %c0_1], %0 {strides = array<i32>} : memref<18x128xf32, #tpu.memory_space<vmem>>, vector<1x128xf32>,
    %c0_2 = arith.constant 0 : index
    %c0_3 = arith.constant 0 : index
    %3 = vector.load %arg1[%c0_2, %c0_3] : memref<16x128xf32, #tpu.memory_space<vmem>>, vector<16x128xf32>
    %cst_4 = arith.constant 0.000000e+00 : f32
    %4 = vector.broadcast %cst_4 : f32 to vector<16x128xf32>
    %5 = arith.maximumf %3, %4 : vector<16x128xf32>
    %c1 = arith.constant 1 : index
    %c0_5 = arith.constant 0 : index
    %6 = vector.load %arg7[%c1, %c0_5] : memref<18x128xf32, #tpu.memory_space<vmem>>, vector<16x128xf32>
    tpu.vector_store %arg7[%c1, %c0_5], %5 {strides = array<i32>} : memref<18x128xf32, #tpu.memory_space<vmem>>, vector<16x128xf32>,
    %cst_6 = arith.constant 0.000000e+00 : f32
    %7 = vector.broadcast %cst_6 : f32 to vector<16x128xf32>
    %c0_7 = arith.constant 0 : index
    %c0_8 = arith.constant 0 : index
    %8 = vector.load %arg7[%c0_7, %c0_8] : memref<18x128xf32, #tpu.memory_space<vmem>>, vector<16x128xf32>
    %c0_9 = arith.constant 0 : index
    %c0_10 = arith.constant 0 : index
    %c0_11 = arith.constant 0 : index
    %9 = vector.load %arg2[%c0_9, %c0_10, %c0_11] : memref<3x128x128xf32, #tpu.memory_space<vmem>>, vector<1x128x128xf32>
    %10 = vector.shape_cast %9 : vector<1x128x128xf32> to vector<128x128xf32>
    %cst_12 = arith.constant dense<0.000000e+00> : vector<16x128xf32>
    %11 = tpu.matmul %8, %10, %cst_12 {dimension_numbers = #tpu.dot_dimension_numbers<[1], [0], [0], [1], [0, 0, 1, 1], [], []>} : vector<16x128xf32>, vector<128x128xf32>, vector<16x128xf32> -> vector<16x128xf32>
    %12 = arith.addf %7, %11 : vector<16x128xf32>
    %c1_13 = arith.constant 1 : index
    %c0_14 = arith.constant 0 : index
    %13 = vector.load %arg7[%c1_13, %c0_14] : memref<18x128xf32, #tpu.memory_space<vmem>>, vector<16x128xf32>
    %c1_15 = arith.constant 1 : index
    %c0_16 = arith.constant 0 : index
    %c0_17 = arith.constant 0 : index
    %14 = vector.load %arg2[%c1_15, %c0_16, %c0_17] : memref<3x128x128xf32, #tpu.memory_space<vmem>>, vector<1x128x128xf32>
    %15 = vector.shape_cast %14 : vector<1x128x128xf32> to vector<128x128xf32>
    %cst_18 = arith.constant dense<0.000000e+00> : vector<16x128xf32>
    %16 = tpu.matmul %13, %15, %cst_18 {dimension_numbers = #tpu.dot_dimension_numbers<[1], [0], [0], [1], [0, 0, 1, 1], [], []>} : vector<16x128xf32>, vector<128x128xf32>, vector<16x128xf32> -> vector<16x128xf32>
    %17 = arith.addf %12, %16 : vector<16x128xf32>
    %c2 = arith.constant 2 : index
    %c0_19 = arith.constant 0 : index
    %18 = vector.load %arg7[%c2, %c0_19] : memref<18x128xf32, #tpu.memory_space<vmem>>, vector<16x128xf32>
    %c2_20 = arith.constant 2 : index
    %c0_21 = arith.constant 0 : index
    %c0_22 = arith.constant 0 : index
    %19 = vector.load %arg2[%c2_20, %c0_21, %c0_22] : memref<3x128x128xf32, #tpu.memory_space<vmem>>, vector<1x128x128xf32>
    %20 = vector.shape_cast %19 : vector<1x128x128xf32> to vector<128x128xf32>
    %cst_23 = arith.constant dense<0.000000e+00> : vector<16x128xf32>
    %21 = tpu.matmul %18, %20, %cst_23 {dimension_numbers = #tpu.dot_dimension_numbers<[1], [0], [0], [1], [0, 0, 1, 1], [], []>} : vector<16x128xf32>, vector<128x128xf32>, vector<16x128xf32> -> vector<16x128xf32>
    %22 = arith.addf %17, %21 : vector<16x128xf32>
    %c0_24 = arith.constant 0 : index
    %c0_25 = arith.constant 0 : index
    %23 = vector.load %arg3[%c0_24, %c0_25] : memref<1x128xf32, #tpu.memory_space<vmem>>, vector<1x128xf32>
    %24 = vector.broadcast %23 : vector<1x128xf32> to vector<16x128xf32>
    %25 = arith.addf %22, %24 : vector<16x128xf32>
    %cst_26 = arith.constant 0.000000e+00 : f32
    %26 = vector.broadcast %cst_26 : f32 to vector<16x128xf32>
    %27 = arith.maximumf %25, %26 : vector<16x128xf32>
    %c1_27 = arith.constant 1 : index
    %c0_28 = arith.constant 0 : index
    %28 = vector.load %arg7[%c1_27, %c0_28] : memref<18x128xf32, #tpu.memory_space<vmem>>, vector<16x128xf32>
    tpu.vector_store %arg7[%c1_27, %c0_28], %27 {strides = array<i32>} : memref<18x128xf32, #tpu.memory_space<vmem>>, vector<16x128xf32>,
    %cst_29 = arith.constant 0.000000e+00 : f32
    %29 = vector.broadcast %cst_29 : f32 to vector<16x128xf32>
    %c0_30 = arith.constant 0 : index
    %c0_31 = arith.constant 0 : index
    %30 = vector.load %arg7[%c0_30, %c0_31] : memref<18x128xf32, #tpu.memory_space<vmem>>, vector<16x128xf32>
    %c0_32 = arith.constant 0 : index
    %c0_33 = arith.constant 0 : index
    %c0_34 = arith.constant 0 : index
    %31 = vector.load %arg4[%c0_32, %c0_33, %c0_34] : memref<3x128x128xf32, #tpu.memory_space<vmem>>, vector<1x128x128xf32>
    %32 = vector.shape_cast %31 : vector<1x128x128xf32> to vector<128x128xf32>
    %cst_35 = arith.constant dense<0.000000e+00> : vector<16x128xf32>
    %33 = tpu.matmul %30, %32, %cst_35 {dimension_numbers = #tpu.dot_dimension_numbers<[1], [0], [0], [1], [0, 0, 1, 1], [], []>} : vector<16x128xf32>, vector<128x128xf32>, vector<16x128xf32> -> vector<16x128xf32>
    %34 = arith.addf %29, %33 : vector<16x128xf32>
    %c1_36 = arith.constant 1 : index
    %c0_37 = arith.constant 0 : index
    %35 = vector.load %arg7[%c1_36, %c0_37] : memref<18x128xf32, #tpu.memory_space<vmem>>, vector<16x128xf32>
    %c1_38 = arith.constant 1 : index
    %c0_39 = arith.constant 0 : index
    %c0_40 = arith.constant 0 : index
    %36 = vector.load %arg4[%c1_38, %c0_39, %c0_40] : memref<3x128x128xf32, #tpu.memory_space<vmem>>, vector<1x128x128xf32>
    %37 = vector.shape_cast %36 : vector<1x128x128xf32> to vector<128x128xf32>
    %cst_41 = arith.constant dense<0.000000e+00> : vector<16x128xf32>
    %38 = tpu.matmul %35, %37, %cst_41 {dimension_numbers = #tpu.dot_dimension_numbers<[1], [0], [0], [1], [0, 0, 1, 1], [], []>} : vector<16x128xf32>, vector<128x128xf32>, vector<16x128xf32> -> vector<16x128xf32>
    %39 = arith.addf %34, %38 : vector<16x128xf32>
    %c2_42 = arith.constant 2 : index
    %c0_43 = arith.constant 0 : index
    %40 = vector.load %arg7[%c2_42, %c0_43] : memref<18x128xf32, #tpu.memory_space<vmem>>, vector<16x128xf32>
    %c2_44 = arith.constant 2 : index
    %c0_45 = arith.constant 0 : index
    %c0_46 = arith.constant 0 : index
    %41 = vector.load %arg4[%c2_44, %c0_45, %c0_46] : memref<3x128x128xf32, #tpu.memory_space<vmem>>, vector<1x128x128xf32>
    %42 = vector.shape_cast %41 : vector<1x128x128xf32> to vector<128x128xf32>
    %cst_47 = arith.constant dense<0.000000e+00> : vector<16x128xf32>
    %43 = tpu.matmul %40, %42, %cst_47 {dimension_numbers = #tpu.dot_dimension_numbers<[1], [0], [0], [1], [0, 0, 1, 1], [], []>} : vector<16x128xf32>, vector<128x128xf32>, vector<16x128xf32> -> vector<16x128xf32>
    %44 = arith.addf %39, %43 : vector<16x128xf32>
    %c0_48 = arith.constant 0 : index
    %c0_49 = arith.constant 0 : index
    %45 = vector.load %arg5[%c0_48, %c0_49] : memref<1x128xf32, #tpu.memory_space<vmem>>, vector<1x128xf32>
    %46 = vector.broadcast %45 : vector<1x128xf32> to vector<16x128xf32>
    %47 = arith.addf %44, %46 : vector<16x128xf32>
    %c0_50 = arith.constant 0 : index
    %c0_51 = arith.constant 0 : index
    %48 = vector.load %arg1[%c0_50, %c0_51] : memref<16x128xf32, #tpu.memory_space<vmem>>, vector<16x128xf32>
    %49 = arith.addf %47, %48 : vector<16x128xf32>
    %c0_52 = arith.constant 0 : index
    %c0_53 = arith.constant 0 : index
    %50 = vector.load %arg6[%c0_52, %c0_53] : memref<16x128xf32, #tpu.memory_space<vmem>>, vector<16x128xf32>
    tpu.vector_store %arg6[%c0_52, %c0_53], %49 {strides = array<i32>} : memref<16x128xf32, #tpu.memory_space<vmem>>, vector<16x128xf32>,
    return
  }
  func.func @transform_0(%arg0: i32) -> (i32, i32) {
    %c0_i32 = arith.constant 0 : i32
    %c0_i32_0 = arith.constant 0 : i32
    %c0_i32_1 = arith.constant 0 : i32
    return %c0_i32, %c0_i32_0 : i32, i32
  }
  func.func @transform_1(%arg0: i32) -> (i32, i32, i32) {
    %c0_i32 = arith.constant 0 : i32
    %c0_i32_0 = arith.constant 0 : i32
    %c0_i32_1 = arith.constant 0 : i32
    %c0_i32_2 = arith.constant 0 : i32
    return %c0_i32, %c0_i32_0, %c0_i32_1 : i32, i32, i32
  }
  func.func @transform_2(%arg0: i32) -> (i32, i32) {
    %c0_i32 = arith.constant 0 : i32
    %c0_i32_0 = arith.constant 0 : i32
    %c0_i32_1 = arith.constant 0 : i32
    return %c0_i32, %c0_i32_0 : i32, i32
  }
  func.func @transform_3(%arg0: i32) -> (i32, i32, i32) {
    %c0_i32 = arith.constant 0 : i32
    %c0_i32_0 = arith.constant 0 : i32
    %c0_i32_1 = arith.constant 0 : i32
    %c0_i32_2 = arith.constant 0 : i32
    return %c0_i32, %c0_i32_0, %c0_i32_1 : i32, i32, i32
  }
  func.func @transform_4(%arg0: i32) -> (i32, i32) {
    %c0_i32 = arith.constant 0 : i32
    %c0_i32_0 = arith.constant 0 : i32
    %c0_i32_1 = arith.constant 0 : i32
    return %c0_i32, %c0_i32_0 : i32, i32
  }
  func.func @transform_5(%arg0: i32) -> (i32, i32) {
    %c0_i32 = arith.constant 0 : i32
    %c0_i32_0 = arith.constant 0 : i32
    %c0_i32_1 = arith.constant 0 : i32
    return %c0_i32, %c0_i32_0 : i32, i32
  }
}

</mosaic_0001>

<llo_original>
// kernel: conv_block_apply.1
$region0: #{conv_block_apply.1}
  #allocation0 [shape = 'u32[]', space=smem, size = 0x4, offset = 0x4, fixed_abs, tag = 'smem constant byte address 0x4 - core index']
  #allocation1 [shape = 'u32[144,128]{1,0:T(1,128)}', space=vmem, size = 0x12000, scoped, tag = 'internal scratch']
  #allocation2 [shape = 'f32[18,128]{1,0:T(8,128)}', space=vmem, size = 0x3000, scoped, tag = 'scratch operand']
  %s0 = inlined_call_operand.vmem [shape: f32[16,128], index: 0, kind: input, shape index: {}]
  %s1 = inlined_call_operand.vmem [shape: f32[3,128,128], index: 1, kind: input, shape index: {}]
  %s2 = inlined_call_operand.vmem [shape: f32[1,128], index: 2, kind: input, shape index: {}]
  %s3 = inlined_call_operand.hbm [shape: f32[3,128,128], index: 3, kind: input, shape index: {}]
  %s4 = inlined_call_operand.vmem [shape: f32[1,128], index: 4, kind: input, shape index: {}]
  %s5 = inlined_call_operand.vmem [shape: f32[16,128], index: 5, kind: output, shape index: {}]
  %s6 = sld [smem:[#allocation0]]
  $region34: #{conv_block_apply.1} parent=0
    _
  %s8 = ssub.s32 1, %s6
  %s9 = scalar_select 0, %s8, %s6
  $region1: #{conv_block_apply.1} parent=0
    #allocation3 [shape = 'u8[196608]{0}', space=vmem, size = 0x30000, scoped, tag = 'input window, operand 3, single buffered']
    #allocation4 [shape = 's32[1]{0}', space=sflag, size = 0x4, scoped, tag = 'scoped memory for conv_block_apply.1']
    %10 = vsyncpa [#allocation4], 0
    // Predicated region
    $region2: #{conv_block_apply.1} parent=1 // pred_check
      _
    $region3: #{conv_block_apply.1} parent=1 // pred_check_branch
      %12 = sbr.rel (0) target = $region5
    $region4: #{conv_block_apply.1} parent=1 // pred_region
      _
    $region5: #{conv_block_apply.1} parent=1 // pred_fallthru
      _
    // Predicated region
    $region6: #{conv_block_apply.1} parent=1 // pred_check
      _
    $region7: #{conv_block_apply.1} parent=1 // pred_check_branch
      %14 = sbr.rel (0) target = $region9
    $region8: #{conv_block_apply.1} parent=1 // pred_region
      _
    $region9: #{conv_block_apply.1} parent=1 // pred_fallthru
      _
    // Predicated region
    $region10: #{conv_block_apply.1} parent=1 // pred_check
      _
    $region11: #{conv_block_apply.1} parent=1 // pred_check_branch
      %16 = sbr.rel (0) target = $region13
    $region12: #{conv_block_apply.1} parent=1 // pred_region
      _
    $region13: #{conv_block_apply.1} parent=1 // pred_fallthru
      _
    // Predicated region
    $region14: #{conv_block_apply.1} parent=1 // pred_check
      _
    $region15: #{conv_block_apply.1} parent=1 // pred_check_branch
      %18 = sbr.rel (0) target = $region17
    $region16: #{conv_block_apply.1} parent=1 // pred_region
      %s20 = ssub.s32 6144, 6144
      %21 = vsyncadd [#allocation4], %s20
      %s22 = sshll.u32 [#allocation3], 4
      %s23 = int_to_ptr.vmem [resolvable:$true] %s22
      %28 = dma.hbm_to_vmem [thread:$0]  %s3, 6144, %s23, [#allocation4], 128, 128, 8
    $region17: #{conv_block_apply.1} parent=1 // pred_fallthru
      _
    // Predicated region
    $region18: #{conv_block_apply.1} parent=1 // pred_check
      _
    $region19: #{conv_block_apply.1} parent=1 // pred_check_branch
      %30 = sbr.rel (0) target = $region21
    $region20: #{conv_block_apply.1} parent=1 // pred_region
      _
    $region21: #{conv_block_apply.1} parent=1 // pred_fallthru
      _
    // Predicated region
    $region22: #{conv_block_apply.1} parent=1 // pred_check
      _
    $region23: #{conv_block_apply.1} parent=1 // pred_check_branch
      %32 = sbr.rel (0) target = $region25
    $region24: #{conv_block_apply.1} parent=1 // pred_region
      %33 = dma.done [#allocation4], 6144
    $region25: #{conv_block_apply.1} parent=1 // pred_fallthru
      _
    %34 = vst [vmem:[#allocation2] sm:$0x1] 0.0
    %35 = vst [vmem:[#allocation2 + $0x11] sm:$0x1] 0.0
    %v36 = vld [vmem:[%s0] sm:$0xff]
    %v37 = vld [vmem:[%s0 + $0x8] sm:$0xff]
    %v38 = vmax.f32 %v36, 0.0
    %v39 = vmax.f32 %v37, 0.0
    %40 = vst [vmem:[#allocation2 + $0x1] sm:$0xff] %v38
    %41 = vst [vmem:[#allocation2 + $0x9] sm:$0xff] %v39
    %v42 = vld [vmem:[#allocation2] sm:$0xff]
    %v43 = vld [vmem:[#allocation2 + $0x8] sm:$0xff]
    %v44 = vld [vmem:[%s1] sm:$0xff]
    %v45 = vld [vmem:[%s1 + $0x8] sm:$0xff]
    %v46 = vld [vmem:[%s1 + $0x10] sm:$0xff]
    %v47 = vld [vmem:[%s1 + $0x18] sm:$0xff]
    %v48 = vld [vmem:[%s1 + $0x20] sm:$0xff]
    %v49 = vld [vmem:[%s1 + $0x28] sm:$0xff]
    %v50 = vld [vmem:[%s1 + $0x30] sm:$0xff]
    %v51 = vld [vmem:[%s1 + $0x38] sm:$0xff]
    %v52 = vld [vmem:[%s1 + $0x40] sm:$0xff]
    %v53 = vld [vmem:[%s1 + $0x48] sm:$0xff]
    %v54 = vld [vmem:[%s1 + $0x50] sm:$0xff]
    %v55 = vld [vmem:[%s1 + $0x58] sm:$0xff]
    %v56 = vld [vmem:[%s1 + $0x60] sm:$0xff]
    %v57 = vld [vmem:[%s1 + $0x68] sm:$0xff]
    %v58 = vld [vmem:[%s1 + $0x70] sm:$0xff]
    %v59 = vld [vmem:[%s1 + $0x78] sm:$0xff]
    %v60 = vld [vmem:[#allocation2 + $0x1] sm:$0xff]
    %v61 = vld [vmem:[#allocation2 + $0x9] sm:$0xff]
    %s62 = scalar_lea.vmem %s1, 128
    %v63 = vld [vmem:[%s62] sm:$0xff]
    %v64 = vld [vmem:[%s62 + $0x8] sm:$0xff]
    %v65 = vld [vmem:[%s62 + $0x10] sm:$0xff]
    %v66 = vld [vmem:[%s62 + $0x18] sm:$0xff]
    %v67 = vld [vmem:[%s62 + $0x20] sm:$0xff]
    %v68 = vld [vmem:[%s62 + $0x28] sm:$0xff]
    %v69 = vld [vmem:[%s62 + $0x30] sm:$0xff]
    %v70 = vld [vmem:[%s62 + $0x38] sm:$0xff]
    %v71 = vld [vmem:[%s62 + $0x40] sm:$0xff]
    %v72 = vld [vmem:[%s62 + $0x48] sm:$0xff]
    %v73 = vld [vmem:[%s62 + $0x50] sm:$0xff]
    %v74 = vld [vmem:[%s62 + $0x58] sm:$0xff]
    %v75 = vld [vmem:[%s62 + $0x60] sm:$0xff]
    %v76 = vld [vmem:[%s62 + $0x68] sm:$0xff]
    %v77 = vld [vmem:[%s62 + $0x70] sm:$0xff]
    %v78 = vld [vmem:[%s62 + $0x78] sm:$0xff]
    %79 = vmatprep.subr.mxu0 0.0
    %80 = vmatpush1.msra.mxu0 %v63
    %81 = vmatprep.subr.mxu0 0.0
    %82 = vmatpush1.msra.mxu0 %v64
    %83 = vmatprep.subr.mxu0 0.0
    %84 = vmatpush1.msra.mxu0 %v65
    %85 = vmatprep.subr.mxu0 0.0
    %86 = vmatpush1.msra.mxu0 %v66
    %87 = vmatprep.subr.mxu0 0.0
    %88 = vmatpush1.msra.mxu0 %v67
    %89 = vmatprep.subr.mxu0 0.0
    %90 = vmatpush1.msra.mxu0 %v68
    %91 = vmatprep.subr.mxu0 0.0
    %92 = vmatpush1.msra.mxu0 %v69
    %93 = vmatprep.subr.mxu0 0.0
    %94 = vmatpush1.msra.mxu0 %v70
    %95 = vmatprep.subr.mxu0 0.0
    %96 = vmatpush1.msra.mxu0 %v71
    %97 = vmatprep.subr.mxu0 0.0
    %98 = vmatpush1.msra.mxu0 %v72
    %99 = vmatprep.subr.mxu0 0.0
    %100 = vmatpush1.msra.mxu0 %v73
    %101 = vmatprep.subr.mxu0 0.0
    %102 = vmatpush1.msra.mxu0 %v74
    %103 = vmatprep.subr.mxu0 0.0
    %104 = vmatpush1.msra.mxu0 %v75
    %105 = vmatprep.subr.mxu0 0.0
    %106 = vmatpush1.msra.mxu0 %v76
    %107 = vmatprep.subr.mxu0 0.0
    %108 = vmatpush1.msra.mxu0 %v77
    %109 = vmatprep.subr.mxu0 0.0
    %110 = vmatpush1.msra.mxu0 %v78
    %111 = vmatprep.subr.mxu0 0.0
    %112 = vmatpush1.msra.mxu0 0.0
    %113 = vmatprep.subr.mxu0 0.0
    %114 = vmatpush1.msra.mxu0 0.0
    %115 = vmatprep.subr.mxu0 0.0
    %116 = vmatpush1.msra.mxu0 0.0
    %117 = vmatprep.subr.mxu0 0.0
    %118 = vmatpush1.msra.mxu0 0.0
    %119 = vmatprep.subr.mxu0 0.0
    %120 = vmatpush1.msra.mxu0 0.0
    %121 = vmatprep.subr.mxu0 0.0
    %122 = vmatpush1.msra.mxu0 0.0
    %123 = vmatprep.subr.mxu0 0.0
    %124 = vmatpush1.msra.mxu0 0.0
    %125 = vmatprep.subr.mxu0 0.0
    %126 = vmatpush1.msra.mxu0 0.0
    %127 = vmatprep.subr.mxu0 0.0
    %128 = vmatpush1.msra.mxu0 0.0
    %129 = vmatprep.subr.mxu0 0.0
    %130 = vmatpush1.msra.mxu0 0.0
    %131 = vmatprep.subr.mxu0 0.0
    %132 = vmatpush1.msra.mxu0 0.0
    %133 = vmatprep.subr.mxu0 0.0
    %134 = vmatpush1.msra.mxu0 0.0
    %135 = vmatprep.subr.mxu0 0.0
    %136 = vmatpush1.msra.mxu0 0.0
    %137 = vmatprep.subr.mxu0 0.0
    %138 = vmatpush1.msra.mxu0 0.0
    %139 = vmatprep.subr.mxu0 0.0
    %140 = vmatpush1.msra.mxu0 0.0
    %141 = vmatprep.subr.mxu0 0.0
    %142 = vmatpush1.msra.mxu0 0.0
    %143 = vmatprep.mubr.f32.mxu0 0.0
    %144 = vmatmul.mubr.f32.gmra.mrb[0].mxu0 %v60
    %v145 = vpop.f32.mrb[0].mxu0
    %v146 = vadd.f32 0.0, %v145
    %v147 = vpop.f32.mrb[0].mxu0
    %148 = vmatprep.mubr.f32.mxu0 0.0
    %149 = vmatmul.mubr.f32.gmra.mrb[0].mxu0 %v61
    %v150 = vpop.f32.mrb[0].mxu0
    %v151 = vadd.f32 0.0, %v150
    %v152 = vpop.f32.mrb[0].mxu0
    %153 = vdwg.mxu0
    %154 = vmatprep.subr.mxu0 0.0
    %155 = vmatpush1.msra.mxu0 %v44
    %156 = vmatprep.subr.mxu0 0.0
    %157 = vmatpush1.msra.mxu0 %v45
    %158 = vmatprep.subr.mxu0 0.0
    %159 = vmatpush1.msra.mxu0 %v46
    %160 = vmatprep.subr.mxu0 0.0
    %161 = vmatpush1.msra.mxu0 %v47
    %162 = vmatprep.subr.mxu0 0.0
    %163 = vmatpush1.msra.mxu0 %v48
    %164 = vmatprep.subr.mxu0 0.0
    %165 = vmatpush1.msra.mxu0 %v49
    %166 = vmatprep.subr.mxu0 0.0
    %167 = vmatpush1.msra.mxu0 %v50
    %168 = vmatprep.subr.mxu0 0.0
    %169 = vmatpush1.msra.mxu0 %v51
    %170 = vmatprep.subr.mxu0 0.0
    %171 = vmatpush1.msra.mxu0 %v52
    %172 = vmatprep.subr.mxu0 0.0
    %173 = vmatpush1.msra.mxu0 %v53
    %174 = vmatprep.subr.mxu0 0.0
    %175 = vmatpush1.msra.mxu0 %v54
    %176 = vmatprep.subr.mxu0 0.0
    %177 = vmatpush1.msra.mxu0 %v55
    %178 = vmatprep.subr.mxu0 0.0
    %179 = vmatpush1.msra.mxu0 %v56
    %180 = vmatprep.subr.mxu0 0.0
    %181 = vmatpush1.msra.mxu0 %v57
    %182 = vmatprep.subr.mxu0 0.0
    %183 = vmatpush1.msra.mxu0 %v58
    %184 = vmatprep.subr.mxu0 0.0
    %185 = vmatpush1.msra.mxu0 %v59
    %186 = vmatprep.subr.mxu0 0.0
    %187 = vmatpush1.msra.mxu0 0.0
    %188 = vmatprep.subr.mxu0 0.0
    %189 = vmatpush1.msra.mxu0 0.0
    %190 = vmatprep.subr.mxu0 0.0
    %191 = vmatpush1.msra.mxu0 0.0
    %192 = vmatprep.subr.mxu0 0.0
    %193 = vmatpush1.msra.mxu0 0.0
    %194 = vmatprep.subr.mxu0 0.0
    %195 = vmatpush1.msra.mxu0 0.0
    %196 = vmatprep.subr.mxu0 0.0
    %197 = vmatpush1.msra.mxu0 0.0
    %198 = vmatprep.subr.mxu0 0.0
    %199 = vmatpush1.msra.mxu0 0.0
    %200 = vmatprep.subr.mxu0 0.0
    %201 = vmatpush1.msra.mxu0 0.0
    %202 = vmatprep.subr.mxu0 0.0
    %203 = vmatpush1.msra.mxu0 0.0
    %204 = vmatprep.subr.mxu0 0.0
    %205 = vmatpush1.msra.mxu0 0.0
    %206 = vmatprep.subr.mxu0 0.0
    %207 = vmatpush1.msra.mxu0 0.0
    %208 = vmatprep.subr.mxu0 0.0
    %209 = vmatpush1.msra.mxu0 0.0
    %210 = vmatprep.subr.mxu0 0.0
    %211 = vmatpush1.msra.mxu0 0.0
    %212 = vmatprep.subr.mxu0 0.0
    %213 = vmatpush1.msra.mxu0 0.0
    %214 = vmatprep.subr.mxu0 0.0
    %215 = vmatpush1.msra.mxu0 0.0
    %216 = vmatprep.subr.mxu0 0.0
    %217 = vmatpush1.msra.mxu0 0.0
    %218 = vmatprep.mubr.f32.mxu0 0.0
    %219 = vmatmul.mubr.f32.gmra.mrb[0].mxu0 %v42
    %v220 = vpop.f32.mrb[0].mxu0
    %v221 = vadd.f32 %v146, %v220
    %v222 = vpop.f32.mrb[0].mxu0
    %223 = vmatprep.mubr.f32.mxu0 0.0
    %224 = vmatmul.mubr.f32.gmra.mrb[0].mxu0 %v43
    %v225 = vpop.f32.mrb[0].mxu0
    %v226 = vadd.f32 %v151, %v225
    %v227 = vpop.f32.mrb[0].mxu0
    %228 = vdwg.mxu0
    %v229 = vld [vmem:[#allocation2 + $0x2] sm:$0xff]
    %v230 = vld [vmem:[#allocation2 + $0xa] sm:$0xff]
    %s231 = scalar_lea.vmem %s1, 256
    %v232 = vld [vmem:[%s231] sm:$0xff]
    %v233 = vld [vmem:[%s231 + $0x8] sm:$0xff]
    %v234 = vld [vmem:[%s231 + $0x10] sm:$0xff]
    %v235 = vld [vmem:[%s231 + $0x18] sm:$0xff]
    %v236 = vld [vmem:[%s231 + $0x20] sm:$0xff]
    %v237 = vld [vmem:[%s231 + $0x28] sm:$0xff]
    %v238 = vld [vmem:[%s231 + $0x30] sm:$0xff]
    %v239 = vld [vmem:[%s231 + $0x38] sm:$0xff]
    %v240 = vld [vmem:[%s231 + $0x40] sm:$0xff]
    %v241 = vld [vmem:[%s231 + $0x48] sm:$0xff]
    %v242 = vld [vmem:[%s231 + $0x50] sm:$0xff]
    %v243 = vld [vmem:[%s231 + $0x58] sm:$0xff]
    %v244 = vld [vmem:[%s231 + $0x60] sm:$0xff]
    %v245 = vld [vmem:[%s231 + $0x68] sm:$0xff]
    %v246 = vld [vmem:[%s231 + $0x70] sm:$0xff]
    %v247 = vld [vmem:[%s231 + $0x78] sm:$0xff]
    %248 = vmatprep.subr.mxu0 0.0
    %249 = vmatpush1.msra.mxu0 %v232
    %250 = vmatprep.subr.mxu0 0.0
    %251 = vmatpush1.msra.mxu0 %v233
    %252 = vmatprep.subr.mxu0 0.0
    %253 = vmatpush1.msra.mxu0 %v234
    %254 = vmatprep.subr.mxu0 0.0
    %255 = vmatpush1.msra.mxu0 %v235
    %256 = vmatprep.subr.mxu0 0.0
    %257 = vmatpush1.msra.mxu0 %v236
    %258 = vmatprep.subr.mxu0 0.0
    %259 = vmatpush1.msra.mxu0 %v237
    %260 = vmatprep.subr.mxu0 0.0
    %261 = vmatpush1.msra.mxu0 %v238
    %262 = vmatprep.subr.mxu0 0.0
    %263 = vmatpush1.msra.mxu0 %v239
    %264 = vmatprep.subr.mxu0 0.0
    %265 = vmatpush1.msra.mxu0 %v240
    %266 = vmatprep.subr.mxu0 0.0
    %267 = vmatpush1.msra.mxu0 %v241
    %268 = vmatprep.subr.mxu0 0.0
    %269 = vmatpush1.msra.mxu0 %v242
    %270 = vmatprep.subr.mxu0 0.0
    %271 = vmatpush1.msra.mxu0 %v243
    %272 = vmatprep.subr.mxu0 0.0
    %273 = vmatpush1.msra.mxu0 %v244
    %274 = vmatprep.subr.mxu0 0.0
    %275 = vmatpush1.msra.mxu0 %v245
    %276 = vmatprep.subr.mxu0 0.0
    %277 = vmatpush1.msra.mxu0 %v246
    %278 = vmatprep.subr.mxu0 0.0
    %279 = vmatpush1.msra.mxu0 %v247
    %280 = vmatprep.subr.mxu0 0.0
    %281 = vmatpush1.msra.mxu0 0.0
    %282 = vmatprep.subr.mxu0 0.0
    %283 = vmatpush1.msra.mxu0 0.0
    %284 = vmatprep.subr.mxu0 0.0
    %285 = vmatpush1.msra.mxu0 0.0
    %286 = vmatprep.subr.mxu0 0.0
    %287 = vmatpush1.msra.mxu0 0.0
    %288 = vmatprep.subr.mxu0 0.0
    %289 = vmatpush1.msra.mxu0 0.0
    %290 = vmatprep.subr.mxu0 0.0
    %291 = vmatpush1.msra.mxu0 0.0
    %292 = vmatprep.subr.mxu0 0.0
    %293 = vmatpush1.msra.mxu0 0.0
    %294 = vmatprep.subr.mxu0 0.0
    %295 = vmatpush1.msra.mxu0 0.0
    %296 = vmatprep.subr.mxu0 0.0
    %297 = vmatpush1.msra.mxu0 0.0
    %298 = vmatprep.subr.mxu0 0.0
    %299 = vmatpush1.msra.mxu0 0.0
    %300 = vmatprep.subr.mxu0 0.0
    %301 = vmatpush1.msra.mxu0 0.0
    %302 = vmatprep.subr.mxu0 0.0
    %303 = vmatpush1.msra.mxu0 0.0
    %304 = vmatprep.subr.mxu0 0.0
    %305 = vmatpush1.msra.mxu0 0.0
    %306 = vmatprep.subr.mxu0 0.0
    %307 = vmatpush1.msra.mxu0 0.0
    %308 = vmatprep.subr.mxu0 0.0
    %309 = vmatpush1.msra.mxu0 0.0
    %310 = vmatprep.subr.mxu0 0.0
    %311 = vmatpush1.msra.mxu0 0.0
    %312 = vmatprep.mubr.f32.mxu0 0.0
    %313 = vmatmul.mubr.f32.gmra.mrb[0].mxu0 %v229
    %v314 = vpop.f32.mrb[0].mxu0
    %v315 = vadd.f32 0.0, %v314
    %v316 = vpop.f32.mrb[0].mxu0
    %317 = vmatprep.mubr.f32.mxu0 0.0
    %318 = vmatmul.mubr.f32.gmra.mrb[0].mxu0 %v230
    %v319 = vpop.f32.mrb[0].mxu0
    %v320 = vadd.f32 0.0, %v319
    %v321 = vpop.f32.mrb[0].mxu0
    %322 = vdwg.mxu0
    %v323 = vadd.f32 %v221, %v315
    %v324 = vadd.f32 %v226, %v320
    %v325 = vld [vmem:[%s2] sm:$0x1]
    %v327 = vlaneseq
    %v328 = vshrl.u32 %v327, 7
    %v329 = vsub.s32 0, %v328
    %v330 = vrot.slane %v325, %v329
    %v332 = vadd.f32 %v323, %v330
    %v333 = vadd.f32 %v324, %v330
    %v334 = vmax.f32 %v332, 0.0
    %v335 = vmax.f32 %v333, 0.0
    %336 = vst [vmem:[#allocation2 + $0x1] sm:$0xff] %v334
    %337 = vst [vmem:[#allocation2 + $0x9] sm:$0xff] %v335
    %v338 = vld [vmem:[#allocation2] sm:$0xff]
    %v339 = vld [vmem:[#allocation2 + $0x8] sm:$0xff]
    %v340 = vld [vmem:[#allocation3] sm:$0xff]
    %v341 = vld [vmem:[#allocation3 + $0x8] sm:$0xff]
    %v342 = vld [vmem:[#allocation3 + $0x10] sm:$0xff]
    %v343 = vld [vmem:[#allocation3 + $0x18] sm:$0xff]
    %v344 = vld [vmem:[#allocation3 + $0x20] sm:$0xff]
    %v345 = vld [vmem:[#allocation3 + $0x28] sm:$0xff]
    %v346 = vld [vmem:[#allocation3 + $0x30] sm:$0xff]
    %v347 = vld [vmem:[#allocation3 + $0x38] sm:$0xff]
    %v348 = vld [vmem:[#allocation3 + $0x40] sm:$0xff]
    %v349 = vld [vmem:[#allocation3 + $0x48] sm:$0xff]
    %v350 = vld [vmem:[#allocation3 + $0x50] sm:$0xff]
    %v351 = vld [vmem:[#allocation3 + $0x58] sm:$0xff]
    %v352 = vld [vmem:[#allocation3 + $0x60] sm:$0xff]
    %v353 = vld [vmem:[#allocation3 + $0x68] sm:$0xff]
    %v354 = vld [vmem:[#allocation3 + $0x70] sm:$0xff]
    %v355 = vld [vmem:[#allocation3 + $0x78] sm:$0xff]
    %v356 = vld [vmem:[#allocation2 + $0x1] sm:$0xff]
    %v357 = vld [vmem:[#allocation2 + $0x9] sm:$0xff]
    %s358 = scalar_lea.vmem [#allocation3], 128
    %v359 = vld [vmem:[%s358] sm:$0xff]
    %v360 = vld [vmem:[%s358 + $0x8] sm:$0xff]
    %v361 = vld [vmem:[%s358 + $0x10] sm:$0xff]
    %v362 = vld [vmem:[%s358 + $0x18] sm:$0xff]
    %v363 = vld [vmem:[%s358 + $0x20] sm:$0xff]
    %v364 = vld [vmem:[%s358 + $0x28] sm:$0xff]
    %v365 = vld [vmem:[%s358 + $0x30] sm:$0xff]
    %v366 = vld [vmem:[%s358 + $0x38] sm:$0xff]
    %v367 = vld [vmem:[%s358 + $0x40] sm:$0xff]
    %v368 = vld [vmem:[%s358 + $0x48] sm:$0xff]
    %v369 = vld [vmem:[%s358 + $0x50] sm:$0xff]
    %v370 = vld [vmem:[%s358 + $0x58] sm:$0xff]
    %v371 = vld [vmem:[%s358 + $0x60] sm:$0xff]
    %v372 = vld [vmem:[%s358 + $0x68] sm:$0xff]
    %v373 = vld [vmem:[%s358 + $0x70] sm:$0xff]
    %v374 = vld [vmem:[%s358 + $0x78] sm:$0xff]
    %375 = vmatprep.subr.mxu0 0.0
    %376 = vmatpush1.msra.mxu0 %v359
    %377 = vmatprep.subr.mxu0 0.0
    %378 = vmatpush1.msra.mxu0 %v360
    %379 = vmatprep.subr.mxu0 0.0
    %380 = vmatpush1.msra.mxu0 %v361
    %381 = vmatprep.subr.mxu0 0.0
    %382 = vmatpush1.msra.mxu0 %v362
    %383 = vmatprep.subr.mxu0 0.0
    %384 = vmatpush1.msra.mxu0 %v363
    %385 = vmatprep.subr.mxu0 0.0
    %386 = vmatpush1.msra.mxu0 %v364
    %387 = vmatprep.subr.mxu0 0.0
    %388 = vmatpush1.msra.mxu0 %v365
    %389 = vmatprep.subr.mxu0 0.0
    %390 = vmatpush1.msra.mxu0 %v366
    %391 = vmatprep.subr.mxu0 0.0
    %392 = vmatpush1.msra.mxu0 %v367
    %393 = vmatprep.subr.mxu0 0.0
    %394 = vmatpush1.msra.mxu0 %v368
    %395 = vmatprep.subr.mxu0 0.0
    %396 = vmatpush1.msra.mxu0 %v369
    %397 = vmatprep.subr.mxu0 0.0
    %398 = vmatpush1.msra.mxu0 %v370
    %399 = vmatprep.subr.mxu0 0.0
    %400 = vmatpush1.msra.mxu0 %v371
    %401 = vmatprep.subr.mxu0 0.0
    %402 = vmatpush1.msra.mxu0 %v372
    %403 = vmatprep.subr.mxu0 0.0
    %404 = vmatpush1.msra.mxu0 %v373
    %405 = vmatprep.subr.mxu0 0.0
    %406 = vmatpush1.msra.mxu0 %v374
    %407 = vmatprep.subr.mxu0 0.0
    %408 = vmatpush1.msra.mxu0 0.0
    %409 = vmatprep.subr.mxu0 0.0
    %410 = vmatpush1.msra.mxu0 0.0
    %411 = vmatprep.subr.mxu0 0.0
    %412 = vmatpush1.msra.mxu0 0.0
    %413 = vmatprep.subr.mxu0 0.0
    %414 = vmatpush1.msra.mxu0 0.0
    %415 = vmatprep.subr.mxu0 0.0
    %416 = vmatpush1.msra.mxu0 0.0
    %417 = vmatprep.subr.mxu0 0.0
    %418 = vmatpush1.msra.mxu0 0.0
    %419 = vmatprep.subr.mxu0 0.0
    %420 = vmatpush1.msra.mxu0 0.0
    %421 = vmatprep.subr.mxu0 0.0
    %422 = vmatpush1.msra.mxu0 0.0
    %423 = vmatprep.subr.mxu0 0.0
    %424 = vmatpush1.msra.mxu0 0.0
    %425 = vmatprep.subr.mxu0 0.0
    %426 = vmatpush1.msra.mxu0 0.0
    %427 = vmatprep.subr.mxu0 0.0
    %428 = vmatpush1.msra.mxu0 0.0
    %429 = vmatprep.subr.mxu0 0.0
    %430 = vmatpush1.msra.mxu0 0.0
    %431 = vmatprep.subr.mxu0 0.0
    %432 = vmatpush1.msra.mxu0 0.0
    %433 = vmatprep.subr.mxu0 0.0
    %434 = vmatpush1.msra.mxu0 0.0
    %435 = vmatprep.subr.mxu0 0.0
    %436 = vmatpush1.msra.mxu0 0.0
    %437 = vmatprep.subr.mxu0 0.0
    %438 = vmatpush1.msra.mxu0 0.0
    %439 = vmatprep.mubr.f32.mxu0 0.0
    %440 = vmatmul.mubr.f32.gmra.mrb[0].mxu0 %v356
    %v441 = vpop.f32.mrb[0].mxu0
    %v442 = vadd.f32 0.0, %v441
    %v443 = vpop.f32.mrb[0].mxu0
    %444 = vmatprep.mubr.f32.mxu0 0.0
    %445 = vmatmul.mubr.f32.gmra.mrb[0].mxu0 %v357
    %v446 = vpop.f32.mrb[0].mxu0
    %v447 = vadd.f32 0.0, %v446
    %v448 = vpop.f32.mrb[0].mxu0
    %449 = vdwg.mxu0
    %450 = vmatprep.subr.mxu0 0.0
    %451 = vmatpush1.msra.mxu0 %v340
    %452 = vmatprep.subr.mxu0 0.0
    %453 = vmatpush1.msra.mxu0 %v341
    %454 = vmatprep.subr.mxu0 0.0
    %455 = vmatpush1.msra.mxu0 %v342
    %456 = vmatprep.subr.mxu0 0.0
    %457 = vmatpush1.msra.mxu0 %v343
    %458 = vmatprep.subr.mxu0 0.0
    %459 = vmatpush1.msra.mxu0 %v344
    %460 = vmatprep.subr.mxu0 0.0
    %461 = vmatpush1.msra.mxu0 %v345
    %462 = vmatprep.subr.mxu0 0.0
    %463 = vmatpush1.msra.mxu0 %v346
    %464 = vmatprep.subr.mxu0 0.0
    %465 = vmatpush1.msra.mxu0 %v347
    %466 = vmatprep.subr.mxu0 0.0
    %467 = vmatpush1.msra.mxu0 %v348
    %468 = vmatprep.subr.mxu0 0.0
    %469 = vmatpush1.msra.mxu0 %v349
    %470 = vmatprep.subr.mxu0 0.0
    %471 = vmatpush1.msra.mxu0 %v350
    %472 = vmatprep.subr.mxu0 0.0
    %473 = vmatpush1.msra.mxu0 %v351
    %474 = vmatprep.subr.mxu0 0.0
    %475 = vmatpush1.msra.mxu0 %v352
    %476 = vmatprep.subr.mxu0 0.0
    %477 = vmatpush1.msra.mxu0 %v353
    %478 = vmatprep.subr.mxu0 0.0
    %479 = vmatpush1.msra.mxu0 %v354
    %480 = vmatprep.subr.mxu0 0.0
    %481 = vmatpush1.msra.mxu0 %v355
    %482 = vmatprep.subr.mxu0 0.0
    %483 = vmatpush1.msra.mxu0 0.0
    %484 = vmatprep.subr.mxu0 0.0
    %485 = vmatpush1.msra.mxu0 0.0
    %486 = vmatprep.subr.mxu0 0.0
    %487 = vmatpush1.msra.mxu0 0.0
    %488 = vmatprep.subr.mxu0 0.0
    %489 = vmatpush1.msra.mxu0 0.0
    %490 = vmatprep.subr.mxu0 0.0
    %491 = vmatpush1.msra.mxu0 0.0
    %492 = vmatprep.subr.mxu0 0.0
    %493 = vmatpush1.msra.mxu0 0.0
    %494 = vmatprep.subr.mxu0 0.0
    %495 = vmatpush1.msra.mxu0 0.0
    %496 = vmatprep.subr.mxu0 0.0
    %497 = vmatpush1.msra.mxu0 0.0
    %498 = vmatprep.subr.mxu0 0.0
    %499 = vmatpush1.msra.mxu0 0.0
    %500 = vmatprep.subr.mxu0 0.0
    %501 = vmatpush1.msra.mxu0 0.0
    %502 = vmatprep.subr.mxu0 0.0
    %503 = vmatpush1.msra.mxu0 0.0
    %504 = vmatprep.subr.mxu0 0.0
    %505 = vmatpush1.msra.mxu0 0.0
    %506 = vmatprep.subr.mxu0 0.0
    %507 = vmatpush1.msra.mxu0 0.0
    %508 = vmatprep.subr.mxu0 0.0
    %509 = vmatpush1.msra.mxu0 0.0
    %510 = vmatprep.subr.mxu0 0.0
    %511 = vmatpush1.msra.mxu0 0.0
    %512 = vmatprep.subr.mxu0 0.0
    %513 = vmatpush1.msra.mxu0 0.0
    %514 = vmatprep.mubr.f32.mxu0 0.0
    %515 = vmatmul.mubr.f32.gmra.mrb[0].mxu0 %v338
    %v516 = vpop.f32.mrb[0].mxu0
    %v517 = vadd.f32 %v442, %v516
    %v518 = vpop.f32.mrb[0].mxu0
    %519 = vmatprep.mubr.f32.mxu0 0.0
    %520 = vmatmul.mubr.f32.gmra.mrb[0].mxu0 %v339
    %v521 = vpop.f32.mrb[0].mxu0
    %v522 = vadd.f32 %v447, %v521
    %v523 = vpop.f32.mrb[0].mxu0
    %524 = vdwg.mxu0
    %v525 = vld [vmem:[#allocation2 + $0x2] sm:$0xff]
    %v526 = vld [vmem:[#allocation2 + $0xa] sm:$0xff]
    %s527 = scalar_lea.vmem [#allocation3], 256
    %v528 = vld [vmem:[%s527] sm:$0xff]
    %v529 = vld [vmem:[%s527 + $0x8] sm:$0xff]
    %v530 = vld [vmem:[%s527 + $0x10] sm:$0xff]
    %v531 = vld [vmem:[%s527 + $0x18] sm:$0xff]
    %v532 = vld [vmem:[%s527 + $0x20] sm:$0xff]
    %v533 = vld [vmem:[%s527 + $0x28] sm:$0xff]
    %v534 = vld [vmem:[%s527 + $0x30] sm:$0xff]
    %v535 = vld [vmem:[%s527 + $0x38] sm:$0xff]
    %v536 = vld [vmem:[%s527 + $0x40] sm:$0xff]
    %v537 = vld [vmem:[%s527 + $0x48] sm:$0xff]
    %v538 = vld [vmem:[%s527 + $0x50] sm:$0xff]
    %v539 = vld [vmem:[%s527 + $0x58] sm:$0xff]
    %v540 = vld [vmem:[%s527 + $0x60] sm:$0xff]
    %v541 = vld [vmem:[%s527 + $0x68] sm:$0xff]
    %v542 = vld [vmem:[%s527 + $0x70] sm:$0xff]
    %v543 = vld [vmem:[%s527 + $0x78] sm:$0xff]
    %544 = vmatprep.subr.mxu0 0.0
    %545 = vmatpush1.msra.mxu0 %v528
    %546 = vmatprep.subr.mxu0 0.0
    %547 = vmatpush1.msra.mxu0 %v529
    %548 = vmatprep.subr.mxu0 0.0
    %549 = vmatpush1.msra.mxu0 %v530
    %550 = vmatprep.subr.mxu0 0.0
    %551 = vmatpush1.msra.mxu0 %v531
    %552 = vmatprep.subr.mxu0 0.0
    %553 = vmatpush1.msra.mxu0 %v532
    %554 = vmatprep.subr.mxu0 0.0
    %555 = vmatpush1.msra.mxu0 %v533
    %556 = vmatprep.subr.mxu0 0.0
    %557 = vmatpush1.msra.mxu0 %v534
    %558 = vmatprep.subr.mxu0 0.0
    %559 = vmatpush1.msra.mxu0 %v535
    %560 = vmatprep.subr.mxu0 0.0
    %561 = vmatpush1.msra.mxu0 %v536
    %562 = vmatprep.subr.mxu0 0.0
    %563 = vmatpush1.msra.mxu0 %v537
    %564 = vmatprep.subr.mxu0 0.0
    %565 = vmatpush1.msra.mxu0 %v538
    %566 = vmatprep.subr.mxu0 0.0
    %567 = vmatpush1.msra.mxu0 %v539
    %568 = vmatprep.subr.mxu0 0.0
    %569 = vmatpush1.msra.mxu0 %v540
    %570 = vmatprep.subr.mxu0 0.0
    %571 = vmatpush1.msra.mxu0 %v541
    %572 = vmatprep.subr.mxu0 0.0
    %573 = vmatpush1.msra.mxu0 %v542
    %574 = vmatprep.subr.mxu0 0.0
    %575 = vmatpush1.msra.mxu0 %v543
    %576 = vmatprep.subr.mxu0 0.0
    %577 = vmatpush1.msra.mxu0 0.0
    %578 = vmatprep.subr.mxu0 0.0
    %579 = vmatpush1.msra.mxu0 0.0
    %580 = vmatprep.subr.mxu0 0.0
    %581 = vmatpush1.msra.mxu0 0.0
    %582 = vmatprep.subr.mxu0 0.0
    %583 = vmatpush1.msra.mxu0 0.0
    %584 = vmatprep.subr.mxu0 0.0
    %585 = vmatpush1.msra.mxu0 0.0
    %586 = vmatprep.subr.mxu0 0.0
    %587 = vmatpush1.msra.mxu0 0.0
    %588 = vmatprep.subr.mxu0 0.0
    %589 = vmatpush1.msra.mxu0 0.0
    %590 = vmatprep.subr.mxu0 0.0
    %591 = vmatpush1.msra.mxu0 0.0
    %592 = vmatprep.subr.mxu0 0.0
    %593 = vmatpush1.msra.mxu0 0.0
    %594 = vmatprep.subr.mxu0 0.0
    %595 = vmatpush1.msra.mxu0 0.0
    %596 = vmatprep.subr.mxu0 0.0
    %597 = vmatpush1.msra.mxu0 0.0
    %598 = vmatprep.subr.mxu0 0.0
    %599 = vmatpush1.msra.mxu0 0.0
    %600 = vmatprep.subr.mxu0 0.0
    %601 = vmatpush1.msra.mxu0 0.0
    %602 = vmatprep.subr.mxu0 0.0
    %603 = vmatpush1.msra.mxu0 0.0
    %604 = vmatprep.subr.mxu0 0.0
    %605 = vmatpush1.msra.mxu0 0.0
    %606 = vmatprep.subr.mxu0 0.0
    %607 = vmatpush1.msra.mxu0 0.0
    %608 = vmatprep.mubr.f32.mxu0 0.0
    %609 = vmatmul.mubr.f32.gmra.mrb[0].mxu0 %v525
    %v610 = vpop.f32.mrb[0].mxu0
    %v611 = vadd.f32 0.0, %v610
    %v612 = vpop.f32.mrb[0].mxu0
    %613 = vmatprep.mubr.f32.mxu0 0.0
    %614 = vmatmul.mubr.f32.gmra.mrb[0].mxu0 %v526
    %v615 = vpop.f32.mrb[0].mxu0
    %v616 = vadd.f32 0.0, %v615
    %v617 = vpop.f32.mrb[0].mxu0
    %618 = vdwg.mxu0
    %v619 = vadd.f32 %v517, %v611
    %v620 = vadd.f32 %v522, %v616
    %v621 = vld [vmem:[%s4] sm:$0x1]
    %v623 = vlaneseq
    %v624 = vshrl.u32 %v623, 7
    %v625 = vsub.s32 0, %v624
    %v626 = vrot.slane %v621, %v625
    %v628 = vadd.f32 %v619, %v626
    %v629 = vadd.f32 %v620, %v626
    %v630 = vld [vmem:[%s0] sm:$0xff]
    %v631 = vld [vmem:[%s0 + $0x8] sm:$0xff]
    %v632 = vadd.f32 %v628, %v630
    %v633 = vadd.f32 %v629, %v631
    %634 = vst [vmem:[%s5] sm:$0xff] %v632
    %635 = vst [vmem:[%s5 + $0x8] sm:$0xff] %v633
    // Predicated region
    $region26: #{conv_block_apply.1} parent=1 // pred_check
      _
    $region27: #{conv_block_apply.1} parent=1 // pred_check_branch
      %637 = sbr.rel (0) target = $region29
    $region28: #{conv_block_apply.1} parent=1 // pred_region
      _
    $region29: #{conv_block_apply.1} parent=1 // pred_fallthru
      _
    // Predicated region
    $region30: #{conv_block_apply.1} parent=1 // pred_check
      _
    $region31: #{conv_block_apply.1} parent=1 // pred_check_branch
      %639 = sbr.rel (0) target = $region33
    $region32: #{conv_block_apply.1} parent=1 // pred_region
      _
    $region33: #{conv_block_apply.1} parent=1 // pred_fallthru
      _
    %640 = vsyncpa [#allocation4], 1

</llo_original>
